<compile_context>
chip_gen: v7x
topology: tpu7x:2x2x1
jax: 0.10.0
libtpu: 0.0.40
codegen_flags: <defaults>
</compile_context>

<pallas_src>
import functools

import jax
import jax.numpy as jnp
from jax.experimental import pallas as pl
from jax.experimental.pallas import tpu as pltpu


# ---------------------------------------------------------------------------
# Kernel body: one (tm, tn) output tile = (tm, K) @ (K, tn), single MXU pass.
# K always fits on-chip for this projector, so there is no reduction grid
# axis, no accumulator scratch and no init/finalize control flow.
# ---------------------------------------------------------------------------
def _proj_kernel(x_ref, w_ref, o_ref):
    x = x_ref[...]
    # Cast activations to bf16 in-register (weight is already bf16): hits the
    # MXU's native bf16 rate while keeping the accumulate in f32.  Casting
    # here (not in the wrapper) avoids an extra HBM read+write of x.
    if x.dtype != jnp.bfloat16:
        x = x.astype(jnp.bfloat16)
    o_ref[...] = jnp.dot(
        x, w_ref[...], preferred_element_type=jnp.float32
    ).astype(o_ref.dtype)


# ---------------------------------------------------------------------------
# VMEM budget: derived from the actual chip instead of fixed constants.
# ---------------------------------------------------------------------------
def _vmem_budget_bytes():
    try:
        cap = int(pltpu.get_tpu_info().vmem_capacity_bytes)
    except Exception:
        cap = 64 * 1024 * 1024  # conservative fallback (v7x per-TC VMEM)
    limit = min(int(cap * 0.75), 100 * 1024 * 1024)  # requested scoped limit
    budget = int(limit * 0.90)                       # headroom for bookkeeping
    return budget, limit


def _sublane(dtype):
    # Rows per sublane-packing unit: 8 for f32, 16 for bf16, 32 for int8/fp8.
    return max(8, 32 // jnp.dtype(dtype).itemsize)


# ---------------------------------------------------------------------------
# Tile selection.  Footprint model (pipeline double-buffers every operand):
#   2*tm*K*x_isz  +  2*K*tn*w_isz  +  2*tm*tn*o_isz  <=  budget
# Prefer tn == full N (weight resident, x streamed exactly once); otherwise
# fall back to lane-dense column slabs.
# ---------------------------------------------------------------------------
def _pick_tiles(m, n, k, x_isz, w_isz, o_isz, sub, budget):
    n_lane = pl.cdiv(n, 128) * 128
    m_ceil = pl.cdiv(m, sub) * sub

    def tm_fitting(tn):
        w_bytes = 2 * k * tn * w_isz
        rem = budget - w_bytes
        if rem <= 0:
            return 0
        return rem // (2 * (k * x_isz + tn * o_isz))

    # 1) Full output width resident in VMEM.
    tn = n_lane
    tm = tm_fitting(tn)

    if tm < min(256, m_ceil):
        # 2) Column-slab fallback: largest tn (multiple of 128) that still
        #    leaves room for a reasonable x/output tile.
        target_tm = min(256, m_ceil)
        tn_cap = (budget - 2 * target_tm * k * x_isz) // max(
            2 * (k * w_isz + target_tm * o_isz), 1
        )
        tn = max(128, min(n_lane, (tn_cap // 128) * 128))
        tm = tm_fitting(tn)

    # 128-granular rounding keeps tiles MXU-friendly on every generation
    # (v5e 4x128^2, v6e/v7x 2x256^2) without over-shrinking like 256-rounding.
    if tm >= 256:
        tm = (tm // 128) * 128
    tm = min(int(tm), 2048, m_ceil)
    tm = max(sub, (tm // sub) * sub)
    return int(tm), int(tn)


# ---------------------------------------------------------------------------
# Public API
# ---------------------------------------------------------------------------
def prepare_projection_weight(weight):
    """One-time conversion of a PyTorch-layout (out_features, in_features)
    nn.Linear weight to the kernel's (in, out) layout, stored as bf16.
    Call at parameter-load time so the per-forward path never pays a
    transpose or cast pass over the weight."""
    return jnp.asarray(weight).T.astype(jnp.bfloat16)


@jax.jit
def detikzify_simple_mlp(x, w_t):
    """y = x @ w_t   (bias-free projection; w_t from prepare_projection_weight).

    Output dtype matches x's dtype; accumulation is f32 on the MXU."""
    *lead, k = x.shape
    k_w, n = w_t.shape
    assert k == k_w, "feature dim mismatch"

    x2d = x.reshape(-1, k)  # (M, K)
    m = x2d.shape[0]

    x_isz = jnp.dtype(x2d.dtype).itemsize
    w_isz = jnp.dtype(w_t.dtype).itemsize
    o_isz = x_isz  # output dtype == input dtype
    sub = _sublane(x2d.dtype)

    budget, vmem_limit = _vmem_budget_bytes()
    tm, tn = _pick_tiles(m, n, k, x_isz, w_isz, o_isz, sub, budget)

    n_tiles = pl.cdiv(n, tn)
    m_tiles = pl.cdiv(m, tm)

    cost = pl.CostEstimate(
        flops=2 * m * k * n,
        transcendentals=0,
        bytes_accessed=m * k * x_isz + k * n * w_isz + m * n * o_isz,
    )

    out2d = pl.pallas_call(
        _proj_kernel,
        out_shape=jax.ShapeDtypeStruct((m, n), x.dtype),
        grid_spec=pltpu.PrefetchScalarGridSpec(
            num_scalar_prefetch=0,
            # N outer, M inner: the (K, tn) weight slab keeps the same block
            # index across the inner M loop, so it is DMA'd from HBM once per
            # slab (exactly once when tn == N, the common case).
            grid=(n_tiles, m_tiles),
            in_specs=[
                pl.BlockSpec((tm, k), lambda j, i: (i, 0)),   # x rows, full K
                pl.BlockSpec((k, tn), lambda j, i: (0, j)),   # weight slab
            ],
            out_specs=pl.BlockSpec((tm, tn), lambda j, i: (i, j)),
        ),
        compiler_params=pltpu.CompilerParams(
            dimension_semantics=("parallel", "parallel"),
            vmem_limit_bytes=vmem_limit,
        ),
        cost_estimate=cost,
    )(x2d, w_t)

    return out2d.reshape(*lead, n)


if __name__ == "__main__":
    # Small config consistent with the module's __init__:
    #   vision_config.hidden_size = 32, concat_factor = 4  -> input_size = 128
    #   text_config.hidden_size   = 128                    -> output_size = 128
    batch, seq = 2, 8
    vision_hidden, concat_factor = 32, 4
    input_size = vision_hidden * concat_factor   # 128
    output_size = 128

    key = jax.random.PRNGKey(0)
    kx, kw = jax.random.split(key)
    x = jax.random.normal(kx, (batch, seq, input_size), dtype=jnp.float32)
    # PyTorch nn.Linear layout: (out_features, in_features).
    weight = jax.random.normal(kw, (output_size, input_size), dtype=jnp.float32) * 0.02

    # One-time weight preparation (outside the hot path / outside jit).
    w_t = prepare_projection_weight(weight)

    y = detikzify_simple_mlp(x, w_t)
    jax.block_until_ready(y)

    # Correctness check against plain JAX f32 reference (same math as
    # nn.Linear); tolerance accounts for the bf16 operand rounding.
    y_ref = x @ weight.T
    assert y.shape == (batch, seq, output_size)
    assert y.dtype == x.dtype
    assert jnp.allclose(y, y_ref, atol=3e-2, rtol=3e-2)

    print("KERNEL_OK")
</pallas_src>

<mosaic_0001>
module attributes {stable_mosaic.version = 11 : i64} {
  func.func @_proj_kernel(%arg0: i32, %arg1: i32, %arg2: memref<16x128xf32, #tpu.memory_space<vmem>>, %arg3: memref<128x128xbf16, #tpu.memory_space<vmem>>, %arg4: memref<16x128xf32, #tpu.memory_space<vmem>>) attributes {dimension_semantics = [#tpu.dimension_semantics<parallel>, #tpu.dimension_semantics<parallel>], iteration_bounds = array<i64: 1, 1>, scalar_prefetch = 0 : i64, scratch_operands = 0 : i64, tpu.core_type = #tpu.core_type<tc>, window_params = [{transform_indices = @transform_0, window_bounds = array<i64: 16, 128>}, {transform_indices = @transform_1, window_bounds = array<i64: 128, 128>}, {transform_indices = @transform_2, window_bounds = array<i64: 16, 128>}]} {
    %c0 = arith.constant 0 : index
    %c0_0 = arith.constant 0 : index
    %0 = vector.load %arg2[%c0, %c0_0] : memref<16x128xf32, #tpu.memory_space<vmem>>, vector<16x128xf32>
    %1 = arith.truncf %0 : vector<16x128xf32> to vector<16x128xbf16>
    %c0_1 = arith.constant 0 : index
    %c0_2 = arith.constant 0 : index
    %2 = vector.load %arg3[%c0_1, %c0_2] : memref<128x128xbf16, #tpu.memory_space<vmem>>, vector<128x128xbf16>
    %cst = arith.constant dense<0.000000e+00> : vector<16x128xf32>
    %3 = tpu.matmul %1, %2, %cst {dimension_numbers = #tpu.dot_dimension_numbers<[1], [0], [0], [1], [0, 0, 1, 1], [], []>} : vector<16x128xbf16>, vector<128x128xbf16>, vector<16x128xf32> -> vector<16x128xf32>
    %c0_3 = arith.constant 0 : index
    %c0_4 = arith.constant 0 : index
    %4 = vector.load %arg4[%c0_3, %c0_4] : memref<16x128xf32, #tpu.memory_space<vmem>>, vector<16x128xf32>
    tpu.vector_store %arg4[%c0_3, %c0_4], %3 {strides = array<i32>} : memref<16x128xf32, #tpu.memory_space<vmem>>, vector<16x128xf32>,
    return
  }
  func.func @transform_0(%arg0: i32, %arg1: i32) -> (i32, i32) {
    %c0_i32 = arith.constant 0 : i32
    %c0_i32_0 = arith.constant 0 : i32
    return %arg1, %c0_i32 : i32, i32
  }
  func.func @transform_1(%arg0: i32, %arg1: i32) -> (i32, i32) {
    %c0_i32 = arith.constant 0 : i32
    %c0_i32_0 = arith.constant 0 : i32
    return %c0_i32, %arg0 : i32, i32
  }
  func.func @transform_2(%arg0: i32, %arg1: i32) -> (i32, i32) {
    %c0_i32 = arith.constant 0 : i32
    return %arg1, %arg0 : i32, i32
  }
}

</mosaic_0001>

<llo_original>
// kernel: detikzify_simple_mlp.1
$region0: #{detikzify_simple_mlp.1}
  #allocation0 [shape = 'u32[]', space=smem, size = 0x4, offset = 0x4, fixed_abs, tag = 'smem constant byte address 0x4 - core index']
  #allocation1 [shape = 'u32[144,128]{1,0:T(1,128)}', space=vmem, size = 0x12000, scoped, tag = 'internal scratch']
  %s0 = inlined_call_operand.hbm [shape: f32[16,128], index: 0, kind: input, shape index: {}]
  %s1 = inlined_call_operand.hbm [shape: bf16[128,128], index: 1, kind: input, shape index: {}]
  %s2 = inlined_call_operand.hbm [shape: f32[16,128], index: 2, kind: output, shape index: {}]
  %s3 = sld [smem:[#allocation0]]
  $region26: #{detikzify_simple_mlp.1} parent=0
    _
  %s5 = ssub.s32 1, %s3
  %s6 = scalar_select 0, %s5, %s3
  $region1: #{detikzify_simple_mlp.1} parent=0
    #allocation2 [shape = 'u8[8192]{0}', space=vmem, size = 0x2000, scoped, tag = 'input window, operand 0, single buffered']
    #allocation3 [shape = 's32[1]{0}', space=sflag, size = 0x4, scoped, tag = 'scoped memory for detikzify_simple_mlp.1']
    #allocation4 [shape = 's32[1]{0}', space=sflag, size = 0x4, scoped, tag = 'scoped memory for detikzify_simple_mlp.1']
    #allocation5 [shape = 'u8[32768]{0}', space=vmem, size = 0x8000, scoped, tag = 'input window, operand 1, single buffered']
    #allocation6 [shape = 's32[1]{0}', space=sflag, size = 0x4, scoped, tag = 'scoped memory for detikzify_simple_mlp.1']
    #allocation7 [shape = 'u8[8192]{0}', space=vmem, size = 0x2000, scoped, tag = 'output window, operand 0, single buffered']
    %7 = vsyncpa [#allocation3], 0
    %8 = vsyncpa [#allocation6], 0
    %9 = vsyncpa [#allocation4], 0
    // Predicated region
    $region2: #{detikzify_simple_mlp.1} parent=1 // pred_check
      _
    $region3: #{detikzify_simple_mlp.1} parent=1 // pred_check_branch
      %11 = sbr.rel (0) target = $region5
    $region4: #{detikzify_simple_mlp.1} parent=1 // pred_region
      %s13 = ssub.s32 256, 256
      %14 = vsyncadd [#allocation3], %s13
      %s15 = sshll.u32 [#allocation2], 4
      %s16 = int_to_ptr.vmem [resolvable:$true] %s15
      %21 = dma.hbm_to_vmem [thread:$0]  %s0, 256, %s16, [#allocation3], 128, 128, 8
    $region5: #{detikzify_simple_mlp.1} parent=1 // pred_fallthru
      _
    // Predicated region
    $region6: #{detikzify_simple_mlp.1} parent=1 // pred_check
      _
    $region7: #{detikzify_simple_mlp.1} parent=1 // pred_check_branch
      %23 = sbr.rel (0) target = $region9
    $region8: #{detikzify_simple_mlp.1} parent=1 // pred_region
      %s25 = ssub.s32 1024, 1024
      %26 = vsyncadd [#allocation6], %s25
      %s27 = sshll.u32 [#allocation5], 4
      %s28 = int_to_ptr.vmem [resolvable:$true] %s27
      %33 = dma.hbm_to_vmem [thread:$0]  %s1, 1024, %s28, [#allocation6], 64, 64, 4
    $region9: #{detikzify_simple_mlp.1} parent=1 // pred_fallthru
      _
    // Predicated region
    $region10: #{detikzify_simple_mlp.1} parent=1 // pred_check
      _
    $region11: #{detikzify_simple_mlp.1} parent=1 // pred_check_branch
      %35 = sbr.rel (0) target = $region13
    $region12: #{detikzify_simple_mlp.1} parent=1 // pred_region
      %36 = dma.done [#allocation3], 256
    $region13: #{detikzify_simple_mlp.1} parent=1 // pred_fallthru
      _
    // Predicated region
    $region14: #{detikzify_simple_mlp.1} parent=1 // pred_check
      _
    $region15: #{detikzify_simple_mlp.1} parent=1 // pred_check_branch
      %38 = sbr.rel (0) target = $region17
    $region16: #{detikzify_simple_mlp.1} parent=1 // pred_region
      %39 = dma.done [#allocation6], 1024
    $region17: #{detikzify_simple_mlp.1} parent=1 // pred_fallthru
      _
    %v41 = vld [vmem:[#allocation2] sm:$0xff]
    %v42 = vld [vmem:[#allocation2 + $0x8] sm:$0xff]
    %v43 = vpack.c.bf16 %v42, %v41
    %v44 = vld [vmem:[#allocation5] sm:$0xf]
    %v45 = vld [vmem:[#allocation5 + $0x4] sm:$0xf]
    %v46 = vld [vmem:[#allocation5 + $0x8] sm:$0xf]
    %v47 = vld [vmem:[#allocation5 + $0xc] sm:$0xf]
    %v48 = vld [vmem:[#allocation5 + $0x10] sm:$0xf]
    %v49 = vld [vmem:[#allocation5 + $0x14] sm:$0xf]
    %v50 = vld [vmem:[#allocation5 + $0x18] sm:$0xf]
    %v51 = vld [vmem:[#allocation5 + $0x1c] sm:$0xf]
    %v52 = vld [vmem:[#allocation5 + $0x20] sm:$0xf]
    %v53 = vld [vmem:[#allocation5 + $0x24] sm:$0xf]
    %v54 = vld [vmem:[#allocation5 + $0x28] sm:$0xf]
    %v55 = vld [vmem:[#allocation5 + $0x2c] sm:$0xf]
    %v56 = vld [vmem:[#allocation5 + $0x30] sm:$0xf]
    %v57 = vld [vmem:[#allocation5 + $0x34] sm:$0xf]
    %v58 = vld [vmem:[#allocation5 + $0x38] sm:$0xf]
    %v59 = vld [vmem:[#allocation5 + $0x3c] sm:$0xf]
    %v76 = vunpack.c.l.b16 %v44
    %v77 = vunpack.c.l.b16 %v45
    %v78 = vunpack.c.l.b16 %v46
    %v79 = vunpack.c.l.b16 %v47
    %v80 = vunpack.c.l.b16 %v48
    %v81 = vunpack.c.l.b16 %v49
    %v82 = vunpack.c.l.b16 %v50
    %v83 = vunpack.c.l.b16 %v51
    %v84 = vunpack.c.l.b16 %v52
    %v85 = vunpack.c.l.b16 %v53
    %v86 = vunpack.c.l.b16 %v54
    %v87 = vunpack.c.l.b16 %v55
    %v88 = vunpack.c.l.b16 %v56
    %v89 = vunpack.c.l.b16 %v57
    %v90 = vunpack.c.l.b16 %v58
    %v91 = vunpack.c.l.b16 %v59
    %v92 = vpack.c.b16 %v77, %v76
    %v93 = vpack.c.b16 %v79, %v78
    %v94 = vpack.c.b16 %v81, %v80
    %v95 = vpack.c.b16 %v83, %v82
    %v96 = vpack.c.b16 %v85, %v84
    %v97 = vpack.c.b16 %v87, %v86
    %v98 = vpack.c.b16 %v89, %v88
    %v99 = vpack.c.b16 %v91, %v90
    %108 = vmatprep.subr.bf16.mxu0 0
    %109 = vmatpush1.bf16.msra.mxu0 %v92
    %110 = vmatprep.subr.bf16.mxu0 0
    %111 = vmatpush1.bf16.msra.mxu0 %v93
    %112 = vmatprep.subr.bf16.mxu0 0
    %113 = vmatpush1.bf16.msra.mxu0 %v94
    %114 = vmatprep.subr.bf16.mxu0 0
    %115 = vmatpush1.bf16.msra.mxu0 %v95
    %116 = vmatprep.subr.bf16.mxu0 0
    %117 = vmatpush1.bf16.msra.mxu0 %v96
    %118 = vmatprep.subr.bf16.mxu0 0
    %119 = vmatpush1.bf16.msra.mxu0 %v97
    %120 = vmatprep.subr.bf16.mxu0 0
    %121 = vmatpush1.bf16.msra.mxu0 %v98
    %122 = vmatprep.subr.bf16.mxu0 0
    %123 = vmatpush1.bf16.msra.mxu0 %v99
    %124 = vmatprep.subr.bf16.mxu0 0
    %125 = vmatpush1.bf16.msra.mxu0 0
    %126 = vmatprep.subr.bf16.mxu0 0
    %127 = vmatpush1.bf16.msra.mxu0 0
    %128 = vmatprep.subr.bf16.mxu0 0
    %129 = vmatpush1.bf16.msra.mxu0 0
    %130 = vmatprep.subr.bf16.mxu0 0
    %131 = vmatpush1.bf16.msra.mxu0 0
    %132 = vmatprep.subr.bf16.mxu0 0
    %133 = vmatpush1.bf16.msra.mxu0 0
    %134 = vmatprep.subr.bf16.mxu0 0
    %135 = vmatpush1.bf16.msra.mxu0 0
    %136 = vmatprep.subr.bf16.mxu0 0
    %137 = vmatpush1.bf16.msra.mxu0 0
    %138 = vmatprep.subr.bf16.mxu0 0
    %139 = vmatpush1.bf16.msra.mxu0 0
    %140 = vmatprep.mubr.bf16.mxu0 0
    %141 = vmatmul.mubr.bf16.gmra.mrb[0].mxu0 %v43
    %v142 = vpop.f32.mrb[0].mxu0
    %v143 = vadd.f32 0.0, %v142
    %v144 = vpop.f32.mrb[0].mxu0
    %v145 = vpop.f32.mrb[0].mxu0
    %v146 = vadd.f32 0.0, %v145
    %v147 = vpop.f32.mrb[0].mxu0
    %148 = vdwg.mxu0
    %149 = vst [vmem:[#allocation7] sm:$0xff] %v143
    %150 = vst [vmem:[#allocation7 + $0x8] sm:$0xff] %v146
    // Predicated region
    $region18: #{detikzify_simple_mlp.1} parent=1 // pred_check
      _
    $region19: #{detikzify_simple_mlp.1} parent=1 // pred_check_branch
      %152 = sbr.rel (0) target = $region21
    $region20: #{detikzify_simple_mlp.1} parent=1 // pred_region
      %s154 = ssub.s32 256, 256
      %155 = vsyncadd [#allocation4], %s154
      %s156 = sshll.u32 [#allocation7], 4
      %s157 = int_to_ptr.vmem [resolvable:$true] %s156
      %162 = dma.vmem_to_hbm [thread:$0]  %s157, 256, %s2, [#allocation4], 128, 128, 8
    $region21: #{detikzify_simple_mlp.1} parent=1 // pred_fallthru
      _
    // Predicated region
    $region22: #{detikzify_simple_mlp.1} parent=1 // pred_check
      _
    $region23: #{detikzify_simple_mlp.1} parent=1 // pred_check_branch
      %164 = sbr.rel (0) target = $region25
    $region24: #{detikzify_simple_mlp.1} parent=1 // pred_region
      %165 = dma.done [#allocation4], 256
    $region25: #{detikzify_simple_mlp.1} parent=1 // pred_fallthru
      _
    %166 = vsyncpa [#allocation3], 1
    %167 = vsyncpa [#allocation6], 1
    %168 = vsyncpa [#allocation4], 1

</llo_original>
